<compile_context>
chip_gen: v7x
topology: tpu7x:2x2x1
jax: 0.10.0
libtpu: 0.0.40
codegen_flags: <defaults>
</compile_context>

<pallas_src>
import functools
from typing import NamedTuple

import jax
import jax.numpy as jnp
from jax.experimental import pallas as pl
from jax.experimental.pallas import tpu as pltpu


def _round_up(x, m):
    return (x + m - 1) // m * m


@functools.lru_cache(maxsize=1)
def _tpu_info():
    """Best-effort (generation, tensorcores_per_chip, vmem_bytes). Conservative defaults."""
    gen, cores, vmem = "unknown", 1, 64 * 1024 * 1024
    try:
        kind = jax.devices()[0].device_kind.lower()
        if "v7" in kind:
            gen, cores, vmem = "v7", 2, 64 * 1024 * 1024
        elif "v6" in kind:
            gen, cores, vmem = "v6", 1, 128 * 1024 * 1024
        elif "v5" in kind:
            gen, cores, vmem = "v5", 1, 128 * 1024 * 1024
    except Exception:
        pass
    return gen, cores, vmem


class FFNDims(NamedTuple):
    d_in: int
    hidden: int
    labels: int
    d_pad: int
    h_pad: int
    l_pad: int
    tile_h: int


class FFNParams(NamedTuple):
    w1: jax.Array  # (d_pad, h_pad)  bf16
    b1: jax.Array  # (1, h_pad)      f32
    w2: jax.Array  # (h_pad, l_pad)  bf16
    b2: jax.Array  # (1, l_pad)      f32


def ffn_kernel(x_ref, w1_ref, b1_ref, w2_ref, b2_ref, out_ref, acc_ref):
    j = pl.program_id(1)

    @pl.when(j == 0)
    def _():
        acc_ref[...] = jnp.zeros_like(acc_ref)

    # fc1 slice: [TB, D] @ [D, TH] -> f32 accumulate, bias add + ReLU in f32.
    h = jnp.dot(x_ref[...], w1_ref[...], preferred_element_type=jnp.float32)
    h = jnp.maximum(h + b1_ref[...], 0.0)

    # fc2 partial product: [TB, TH] @ [TH, L] accumulated in f32 (h downcast
    # to bf16 for the MXU: standard mixed precision).
    acc_ref[...] += jnp.dot(h.astype(w2_ref.dtype), w2_ref[...],
                            preferred_element_type=jnp.float32)

    @pl.when(j == pl.num_programs(1) - 1)
    def _():
        out_ref[...] = (acc_ref[...] + b2_ref[...]).astype(out_ref.dtype)


def prepare_ffn_weights(w1, b1, w2, b2, *, tile_h=None):
    """Pad + cast the weights ONCE (hoisted out of the per-call hot path).

    Zero padding is numerically exact: padded input rows contribute 0, padded
    hidden units are ReLU(0 + 0) = 0 and multiply zero rows of w2, padded label
    columns are sliced off.
    """
    D, H = w1.shape
    L = w2.shape[1]
    assert w2.shape[0] == H
    b1 = jnp.reshape(b1, (1, H))
    b2 = jnp.reshape(b2, (1, L))

    gen, _, vmem_bytes = _tpu_info()
    D_pad = _round_up(D, 128)
    L_pad = _round_up(L, 128)

    if tile_h is None:
        # Budget-derived hidden tile: keep double-buffered tiles + f32 accumulator
        # + h intermediate within ~70% of this generation's physical VMEM.
        block_b_nom = 256 if gen == "v6" else 128
        target = {"v6": 2048, "v5": 1024}.get(gen, 512)
        budget = int(0.70 * vmem_bytes)
        fixed = (2 * block_b_nom * D_pad * 2        # x tile (bf16, dbl-buffered)
                 + 2 * L_pad * 4                    # b2 (f32)
                 + 2 * block_b_nom * L_pad * 4      # out tile (f32 worst case)
                 + block_b_nom * L_pad * 4)         # accumulator scratch
        per_h = (2 * D_pad * 2                      # w1 slice (bf16, dbl-buffered)
                 + 2 * L_pad * 2                    # w2 slice (bf16, dbl-buffered)
                 + 2 * 4                            # b1 slice (f32, dbl-buffered)
                 + block_b_nom * 4)                 # h intermediate (f32)
        fit = max(budget - fixed, 0) // per_h
        tile_h = max(128, min(target, (fit // 128) * 128))
    tile_h = max(128, min(_round_up(tile_h, 128), _round_up(H, 128)))

    H_pad = _round_up(H, tile_h)
    f32, bf16 = jnp.float32, jnp.bfloat16
    w1_p = jnp.pad(w1.astype(f32), ((0, D_pad - D), (0, H_pad - H))).astype(bf16)
    b1_p = jnp.pad(b1.astype(f32), ((0, 0), (0, H_pad - H)))
    w2_p = jnp.pad(w2.astype(f32), ((0, H_pad - H), (0, L_pad - L))).astype(bf16)
    b2_p = jnp.pad(b2.astype(f32), ((0, 0), (0, L_pad - L)))

    dims = FFNDims(D, H, L, D_pad, H_pad, L_pad, int(tile_h))
    return FFNParams(w1_p, b1_p, w2_p, b2_p), dims


def _choose_block_b(B, gen, cores):
    # v6e: M=256 fills the 2x256^2 MXU and halves weight re-streaming across
    # batch tiles; v5e/v7x keep 128 (matches 128-wide MXU / tighter VMEM).
    block_b = 256 if (gen == "v6" and B >= 512) else 128
    block_b = max(8, min(block_b, _round_up(B, 8)))
    b_pad = _round_up(B, block_b)
    if cores >= 2 and b_pad // block_b < 2 and B > 8:
        # Guarantee >= 2 batch tiles so the "parallel" axis shards across both
        # TensorCores on v7x-class chips.
        block_b = _round_up(-(-B // 2), 8)
        b_pad = _round_up(B, block_b)
    return block_b, b_pad


@functools.partial(jax.jit, static_argnames=("dims", "block_b"))
def _ffn_forward_pallas(x, w1_p, b1_p, w2_p, b2_p, *, dims, block_b):
    d = dims
    B = x.shape[0]
    B_pad = _round_up(B, block_b)
    out_dtype = x.dtype
    out_bytes = jnp.dtype(out_dtype).itemsize

    # Only x is padded / cast in the hot path; weights arrive pre-padded bf16.
    x_p = jnp.pad(x, ((0, B_pad - B), (0, d.d_pad - d.d_in))).astype(jnp.bfloat16)

    grid = (B_pad // block_b, d.h_pad // d.tile_h)

    # Scheduler hint.
    flops = 2 * B_pad * d.h_pad * (d.d_pad + d.l_pad)
    bytes_accessed = (2 * (B_pad * d.d_pad + d.d_pad * d.h_pad + d.h_pad * d.l_pad)
                      + 4 * (d.h_pad + d.l_pad)
                      + out_bytes * B_pad * d.l_pad)
    cost = pl.CostEstimate(flops=int(flops), transcendentals=0,
                           bytes_accessed=int(bytes_accessed))

    # Rough resident VMEM (double-buffered tiles + accumulator + h intermediate).
    vmem_est = int(1.3 * (
        2 * block_b * d.d_pad * 2          # x tile (bf16)
        + 2 * d.d_pad * d.tile_h * 2       # w1 tile (bf16)
        + 2 * d.tile_h * 4                 # b1 tile (f32)
        + 2 * d.tile_h * d.l_pad * 2       # w2 tile (bf16)
        + 2 * d.l_pad * 4                  # b2 tile (f32)
        + 2 * block_b * d.l_pad * out_bytes  # out tile
        + block_b * d.l_pad * 4            # accumulator scratch
        + block_b * d.tile_h * 4))         # h intermediate
    _, _, vmem_cap = _tpu_info()
    # Always set the scoped-VMEM limit (v5e default is only 16 MiB), clamped to
    # this generation's physical VMEM.
    vmem_limit = min(max(vmem_est, 16 * 1024 * 1024), vmem_cap)

    out_padded = pl.pallas_call(
        ffn_kernel,
        out_shape=jax.ShapeDtypeStruct((B_pad, d.l_pad), out_dtype),
        grid_spec=pltpu.PrefetchScalarGridSpec(
            num_scalar_prefetch=0,
            grid=grid,
            in_specs=[
                pl.BlockSpec((block_b, d.d_pad), lambda i, j: (i, 0)),   # x
                pl.BlockSpec((d.d_pad, d.tile_h), lambda i, j: (0, j)),  # w1 slice
                pl.BlockSpec((1, d.tile_h), lambda i, j: (0, j)),        # b1 slice
                pl.BlockSpec((d.tile_h, d.l_pad), lambda i, j: (j, 0)),  # w2 slice
                pl.BlockSpec((1, d.l_pad), lambda i, j: (0, 0)),         # b2
            ],
            out_specs=pl.BlockSpec((block_b, d.l_pad), lambda i, j: (i, 0)),
            scratch_shapes=[pltpu.VMEM((block_b, d.l_pad), jnp.float32)],
        ),
        compiler_params=pltpu.CompilerParams(
            dimension_semantics=("parallel", "arbitrary"),
            vmem_limit_bytes=vmem_limit,
        ),
        cost_estimate=cost,
    )(x_p, w1_p, b1_p, w2_p, b2_p)

    return out_padded[:B, :d.labels]


@functools.partial(jax.jit, static_argnames=("dims",))
def _ffn_forward_xla(x, w1_p, b1_p, w2_p, b2_p, *, dims):
    # Small-shape fallback: same mixed-precision math on the pre-padded weights.
    bf16 = jnp.bfloat16
    x_b = jnp.pad(x, ((0, 0), (0, dims.d_pad - dims.d_in))).astype(bf16)
    h = jnp.maximum(jnp.dot(x_b, w1_p, preferred_element_type=jnp.float32) + b1_p, 0.0)
    out = jnp.dot(h.astype(bf16), w2_p, preferred_element_type=jnp.float32) + b2_p
    return out[:, :dims.labels].astype(x.dtype)


def ffn_forward(x, params, dims, *, force_pallas=False, block_b=None):
    """FFN forward: x -> relu(x @ w1 + b1) @ w2 + b2."""
    gen, cores, _ = _tpu_info()
    B = x.shape[0]
    if block_b is None:
        block_b, b_pad = _choose_block_b(B, gen, cores)
    else:
        block_b = max(8, min(_round_up(block_b, 8), _round_up(B, 8)))
        b_pad = _round_up(B, block_b)
    grid_steps = (b_pad // block_b) * (dims.h_pad // dims.tile_h)
    if not force_pallas and grid_steps <= 1:
        # One grid step = pure launch/DMA overhead + MXU work on padding zeros;
        # XLA's fused dot is strictly faster at this size.
        return _ffn_forward_xla(x, *params, dims=dims)
    return _ffn_forward_pallas(x, *params, dims=dims, block_b=block_b)


def init_ffn_params(key, input_dim, hidden_dim, num_labels, dtype=jnp.float32):
    # Mirrors torch.nn.Linear default init: U(-1/sqrt(fan_in), +1/sqrt(fan_in)).
    # Weights stored as [in_features, out_features] so the kernel computes x @ W + b.
    k1, k2, k3, k4 = jax.random.split(key, 4)
    bound1 = 1.0 / jnp.sqrt(input_dim)
    bound2 = 1.0 / jnp.sqrt(hidden_dim)
    w1 = jax.random.uniform(k1, (input_dim, hidden_dim), dtype, -bound1, bound1)
    b1 = jax.random.uniform(k2, (hidden_dim,), dtype, -bound1, bound1)
    w2 = jax.random.uniform(k3, (hidden_dim, num_labels), dtype, -bound2, bound2)
    b2 = jax.random.uniform(k4, (num_labels,), dtype, -bound2, bound2)
    return w1, b1, w2, b2


if __name__ == "__main__":
    bf = jnp.bfloat16

    # Small shapes consistent with the module: batch=16, input_dim=32,
    # hidden_dim=64, num_labels=8.
    B, D_IN, HID, LBL = 16, 32, 64, 8
    key = jax.random.PRNGKey(0)
    kx, kp, kx2, kp2 = jax.random.split(key, 4)

    x = jax.random.normal(kx, (B, D_IN), dtype=jnp.float32)
    w1, b1, w2, b2 = init_ffn_params(kp, D_IN, HID, LBL)
    params, dims = prepare_ffn_weights(w1, b1, w2, b2)

    # Force the Pallas path (auto-dispatch would use the XLA fallback here).
    out = jax.block_until_ready(ffn_forward(x, params, dims, force_pallas=True))
    assert out.shape == (B, LBL)

    # Mixed-precision reference (bf16 matmul inputs, f32 accumulation) -- tight check.
    h_ref = jnp.maximum(
        jnp.dot(x.astype(bf), w1.astype(bf), preferred_element_type=jnp.float32) + b1, 0.0)
    ref_mp = jnp.dot(h_ref.astype(bf), w2.astype(bf),
                     preferred_element_type=jnp.float32) + b2
    assert jnp.allclose(out, ref_mp, atol=5e-3, rtol=5e-3), "mismatch vs mixed-precision ref"

    # Full-f32 reference -- loose sanity check documenting the bf16 matmul choice.
    ref_f32 = jnp.maximum(x @ w1 + b1, 0.0) @ w2 + b2
    assert jnp.allclose(out, ref_f32, atol=5e-2, rtol=5e-2), "mismatch vs f32 ref"

    # Auto-dispatch (XLA fallback at this size) must agree with the Pallas path.
    out_auto = jax.block_until_ready(ffn_forward(x, params, dims))
    assert jnp.allclose(out, out_auto, atol=5e-3, rtol=5e-3), "fallback mismatch"

    # Second case: exercises a multi-step hidden reduction (tile_h=128, H=256)
    # and, on 2-TensorCore chips, a split batch axis.
    B2, D2, H2, L2 = 32, 48, 256, 10
    x2 = jax.random.normal(kx2, (B2, D2), dtype=jnp.float32)
    w1b, b1b, w2b, b2b = init_ffn_params(kp2, D2, H2, L2)
    params2, dims2 = prepare_ffn_weights(w1b, b1b, w2b, b2b, tile_h=128)
    out2 = jax.block_until_ready(ffn_forward(x2, params2, dims2, force_pallas=True))
    h2 = jnp.maximum(
        jnp.dot(x2.astype(bf), w1b.astype(bf), preferred_element_type=jnp.float32) + b1b, 0.0)
    ref2 = jnp.dot(h2.astype(bf), w2b.astype(bf),
                   preferred_element_type=jnp.float32) + b2b
    assert jnp.allclose(out2, ref2, atol=5e-3, rtol=5e-3), "mismatch on tiled-H case"

    print("KERNEL_OK")
</pallas_src>

<mosaic_0001>
module attributes {stable_mosaic.version = 11 : i64} {
  func.func @ffn_kernel(%arg0: i32, %arg1: i32, %arg2: memref<16x128xbf16, #tpu.memory_space<vmem>>, %arg3: memref<128x128xbf16, #tpu.memory_space<vmem>>, %arg4: memref<1x128xf32, #tpu.memory_space<vmem>>, %arg5: memref<128x128xbf16, #tpu.memory_space<vmem>>, %arg6: memref<1x128xf32, #tpu.memory_space<vmem>>, %arg7: memref<16x128xf32, #tpu.memory_space<vmem>>, %arg8: memref<16x128xf32, #tpu.memory_space<vmem>>) attributes {dimension_semantics = [#tpu.dimension_semantics<parallel>, #tpu.dimension_semantics<arbitrary>], iteration_bounds = array<i64: 1, 1>, scalar_prefetch = 0 : i64, scratch_operands = 1 : i64, tpu.core_type = #tpu.core_type<tc>, window_params = [{transform_indices = @transform_0, window_bounds = array<i64: 16, 128>}, {transform_indices = @transform_1, window_bounds = array<i64: 128, 128>}, {transform_indices = @transform_2, window_bounds = array<i64: 1, 128>}, {transform_indices = @transform_3, window_bounds = array<i64: 128, 128>}, {pipeline_mode = #tpu.pipeline_mode<synchronous>, transform_indices = @transform_4, window_bounds = array<i64: 1, 128>}, {transform_indices = @transform_5, window_bounds = array<i64: 16, 128>}]} {
    %c0_i32 = arith.constant 0 : i32
    %0 = arith.cmpi eq, %arg1, %c0_i32 : i32
    %1 = arith.extui %0 : i1 to i32
    %c0_i32_0 = arith.constant 0 : i32
    %2 = arith.cmpi ne, %1, %c0_i32_0 : i32
    scf.if %2 {
      %cst_16 = arith.constant 0.000000e+00 : f32
      %20 = vector.broadcast %cst_16 : f32 to vector<16x128xf32>
      %c0_17 = arith.constant 0 : index
      %c0_18 = arith.constant 0 : index
      %21 = vector.load %arg8[%c0_17, %c0_18] : memref<16x128xf32, #tpu.memory_space<vmem>>, vector<16x128xf32>
      tpu.vector_store %arg8[%c0_17, %c0_18], %20 {strides = array<i32>} : memref<16x128xf32, #tpu.memory_space<vmem>>, vector<16x128xf32>,
    } else {
    }
    %c0 = arith.constant 0 : index
    %c0_1 = arith.constant 0 : index
    %3 = vector.load %arg2[%c0, %c0_1] : memref<16x128xbf16, #tpu.memory_space<vmem>>, vector<16x128xbf16>
    %c0_2 = arith.constant 0 : index
    %c0_3 = arith.constant 0 : index
    %4 = vector.load %arg3[%c0_2, %c0_3] : memref<128x128xbf16, #tpu.memory_space<vmem>>, vector<128x128xbf16>
    %cst = arith.constant dense<0.000000e+00> : vector<16x128xf32>
    %5 = tpu.matmul %3, %4, %cst {dimension_numbers = #tpu.dot_dimension_numbers<[1], [0], [0], [1], [0, 0, 1, 1], [], []>} : vector<16x128xbf16>, vector<128x128xbf16>, vector<16x128xf32> -> vector<16x128xf32>
    %c0_4 = arith.constant 0 : index
    %c0_5 = arith.constant 0 : index
    %6 = vector.load %arg4[%c0_4, %c0_5] : memref<1x128xf32, #tpu.memory_space<vmem>>, vector<1x128xf32>
    %7 = vector.broadcast %6 : vector<1x128xf32> to vector<16x128xf32>
    %8 = arith.addf %5, %7 : vector<16x128xf32>
    %cst_6 = arith.constant 0.000000e+00 : f32
    %9 = vector.broadcast %cst_6 : f32 to vector<16x128xf32>
    %10 = arith.maximumf %8, %9 : vector<16x128xf32>
    %c0_7 = arith.constant 0 : index
    %c0_8 = arith.constant 0 : index
    %11 = vector.load %arg8[%c0_7, %c0_8] : memref<16x128xf32, #tpu.memory_space<vmem>>, vector<16x128xf32>
    %12 = arith.truncf %10 : vector<16x128xf32> to vector<16x128xbf16>
    %c0_9 = arith.constant 0 : index
    %c0_10 = arith.constant 0 : index
    %13 = vector.load %arg5[%c0_9, %c0_10] : memref<128x128xbf16, #tpu.memory_space<vmem>>, vector<128x128xbf16>
    %cst_11 = arith.constant dense<0.000000e+00> : vector<16x128xf32>
    %14 = tpu.matmul %12, %13, %cst_11 {dimension_numbers = #tpu.dot_dimension_numbers<[1], [0], [0], [1], [0, 0, 1, 1], [], []>} : vector<16x128xbf16>, vector<128x128xbf16>, vector<16x128xf32> -> vector<16x128xf32>
    %15 = arith.addf %11, %14 : vector<16x128xf32>
    %c0_12 = arith.constant 0 : index
    %c0_13 = arith.constant 0 : index
    %16 = vector.load %arg8[%c0_12, %c0_13] : memref<16x128xf32, #tpu.memory_space<vmem>>, vector<16x128xf32>
    tpu.vector_store %arg8[%c0_12, %c0_13], %15 {strides = array<i32>} : memref<16x128xf32, #tpu.memory_space<vmem>>, vector<16x128xf32>,
    %c0_i32_14 = arith.constant 0 : i32
    %17 = arith.cmpi eq, %arg1, %c0_i32_14 : i32
    %18 = arith.extui %17 : i1 to i32
    %c0_i32_15 = arith.constant 0 : i32
    %19 = arith.cmpi ne, %18, %c0_i32_15 : i32
    scf.if %19 {
      %c0_16 = arith.constant 0 : index
      %c0_17 = arith.constant 0 : index
      %20 = vector.load %arg8[%c0_16, %c0_17] : memref<16x128xf32, #tpu.memory_space<vmem>>, vector<16x128xf32>
      %c0_18 = arith.constant 0 : index
      %c0_19 = arith.constant 0 : index
      %21 = vector.load %arg6[%c0_18, %c0_19] : memref<1x128xf32, #tpu.memory_space<vmem>>, vector<1x128xf32>
      %22 = vector.broadcast %21 : vector<1x128xf32> to vector<16x128xf32>
      %23 = arith.addf %20, %22 : vector<16x128xf32>
      %c0_20 = arith.constant 0 : index
      %c0_21 = arith.constant 0 : index
      %24 = vector.load %arg7[%c0_20, %c0_21] : memref<16x128xf32, #tpu.memory_space<vmem>>, vector<16x128xf32>
      tpu.vector_store %arg7[%c0_20, %c0_21], %23 {strides = array<i32>} : memref<16x128xf32, #tpu.memory_space<vmem>>, vector<16x128xf32>,
    } else {
    }
    return
  }
  func.func @transform_0(%arg0: i32, %arg1: i32) -> (i32, i32) {
    %c0_i32 = arith.constant 0 : i32
    %c0_i32_0 = arith.constant 0 : i32
    return %arg0, %c0_i32 : i32, i32
  }
  func.func @transform_1(%arg0: i32, %arg1: i32) -> (i32, i32) {
    %c0_i32 = arith.constant 0 : i32
    %c0_i32_0 = arith.constant 0 : i32
    return %c0_i32, %arg1 : i32, i32
  }
  func.func @transform_2(%arg0: i32, %arg1: i32) -> (i32, i32) {
    %c0_i32 = arith.constant 0 : i32
    %c0_i32_0 = arith.constant 0 : i32
    return %c0_i32, %arg1 : i32, i32
  }
  func.func @transform_3(%arg0: i32, %arg1: i32) -> (i32, i32) {
    %c0_i32 = arith.constant 0 : i32
    %c0_i32_0 = arith.constant 0 : i32
    return %arg1, %c0_i32 : i32, i32
  }
  func.func @transform_4(%arg0: i32, %arg1: i32) -> (i32, i32) {
    %c0_i32 = arith.constant 0 : i32
    %c0_i32_0 = arith.constant 0 : i32
    %c0_i32_1 = arith.constant 0 : i32
    return %c0_i32, %c0_i32_0 : i32, i32
  }
  func.func @transform_5(%arg0: i32, %arg1: i32) -> (i32, i32) {
    %c0_i32 = arith.constant 0 : i32
    %c0_i32_0 = arith.constant 0 : i32
    return %arg0, %c0_i32 : i32, i32
  }
}

</mosaic_0001>

<llo_original>
// kernel: _ffn_forward_pallas.1
$region0: #{_ffn_forward_pallas.1}
  #allocation0 [shape = 'u32[]', space=smem, size = 0x4, offset = 0x4, fixed_abs, tag = 'smem constant byte address 0x4 - core index']
  #allocation1 [shape = 'u32[144,128]{1,0:T(1,128)}', space=vmem, size = 0x12000, scoped, tag = 'internal scratch']
  #allocation2 [shape = 'f32[16,128]{1,0:T(8,128)}', space=vmem, size = 0x2000, scoped, tag = 'scratch operand']
  %s0 = inlined_call_operand.vmem [shape: bf16[16,128], index: 0, kind: input, shape index: {}]
  %s1 = inlined_call_operand.hbm [shape: bf16[128,128], index: 1, kind: input, shape index: {}]
  %s2 = inlined_call_operand.vmem [shape: f32[1,128], index: 2, kind: input, shape index: {}]
  %s3 = inlined_call_operand.hbm [shape: bf16[128,128], index: 3, kind: input, shape index: {}]
  %s4 = inlined_call_operand.vmem [shape: f32[1,128], index: 4, kind: input, shape index: {}]
  %s5 = inlined_call_operand.vmem [shape: f32[16,128], index: 5, kind: output, shape index: {}]
  %s6 = sld [smem:[#allocation0]]
  $region46: #{_ffn_forward_pallas.1} parent=0
    _
  %s8 = ssub.s32 1, %s6
  %s9 = scalar_select 0, %s8, %s6
  $region1: #{_ffn_forward_pallas.1} parent=0
    #allocation3 [shape = 'u8[32768]{0}', space=vmem, size = 0x8000, scoped, tag = 'input window, operand 1, single buffered']
    #allocation4 [shape = 's32[1]{0}', space=sflag, size = 0x4, scoped, tag = 'scoped memory for _ffn_forward_pallas.1']
    #allocation5 [shape = 'u8[32768]{0}', space=vmem, size = 0x8000, scoped, tag = 'input window, operand 3, single buffered']
    #allocation6 [shape = 's32[1]{0}', space=sflag, size = 0x4, scoped, tag = 'scoped memory for _ffn_forward_pallas.1']
    %10 = vsyncpa [#allocation4], 0
    %11 = vsyncpa [#allocation6], 0
    // Predicated region
    $region2: #{_ffn_forward_pallas.1} parent=1 // pred_check
      _
    $region3: #{_ffn_forward_pallas.1} parent=1 // pred_check_branch
      %13 = sbr.rel (0) target = $region5
    $region4: #{_ffn_forward_pallas.1} parent=1 // pred_region
      _
    $region5: #{_ffn_forward_pallas.1} parent=1 // pred_fallthru
      _
    // Predicated region
    $region6: #{_ffn_forward_pallas.1} parent=1 // pred_check
      _
    $region7: #{_ffn_forward_pallas.1} parent=1 // pred_check_branch
      %15 = sbr.rel (0) target = $region9
    $region8: #{_ffn_forward_pallas.1} parent=1 // pred_region
      %s17 = ssub.s32 1024, 1024
      %18 = vsyncadd [#allocation4], %s17
      %s19 = sshll.u32 [#allocation3], 4
      %s20 = int_to_ptr.vmem [resolvable:$true] %s19
      %25 = dma.hbm_to_vmem [thread:$0]  %s1, 1024, %s20, [#allocation4], 64, 64, 4
    $region9: #{_ffn_forward_pallas.1} parent=1 // pred_fallthru
      _
    // Predicated region
    $region10: #{_ffn_forward_pallas.1} parent=1 // pred_check
      _
    $region11: #{_ffn_forward_pallas.1} parent=1 // pred_check_branch
      %27 = sbr.rel (0) target = $region13
    $region12: #{_ffn_forward_pallas.1} parent=1 // pred_region
      _
    $region13: #{_ffn_forward_pallas.1} parent=1 // pred_fallthru
      _
    // Predicated region
    $region14: #{_ffn_forward_pallas.1} parent=1 // pred_check
      _
    $region15: #{_ffn_forward_pallas.1} parent=1 // pred_check_branch
      %29 = sbr.rel (0) target = $region17
    $region16: #{_ffn_forward_pallas.1} parent=1 // pred_region
      %s31 = ssub.s32 1024, 1024
      %32 = vsyncadd [#allocation6], %s31
      %s33 = sshll.u32 [#allocation5], 4
      %s34 = int_to_ptr.vmem [resolvable:$true] %s33
      %39 = dma.hbm_to_vmem [thread:$0]  %s3, 1024, %s34, [#allocation6], 64, 64, 4
    $region17: #{_ffn_forward_pallas.1} parent=1 // pred_fallthru
      _
    // Predicated region
    $region18: #{_ffn_forward_pallas.1} parent=1 // pred_check
      _
    $region19: #{_ffn_forward_pallas.1} parent=1 // pred_check_branch
      %41 = sbr.rel (0) target = $region21
    $region20: #{_ffn_forward_pallas.1} parent=1 // pred_region
      _
    $region21: #{_ffn_forward_pallas.1} parent=1 // pred_fallthru
      _
    // Predicated region
    $region22: #{_ffn_forward_pallas.1} parent=1 // pred_check
      _
    $region23: #{_ffn_forward_pallas.1} parent=1 // pred_check_branch
      %43 = sbr.rel (0) target = $region25
    $region24: #{_ffn_forward_pallas.1} parent=1 // pred_region
      %44 = dma.done [#allocation4], 1024
    $region25: #{_ffn_forward_pallas.1} parent=1 // pred_fallthru
      _
    // Predicated region
    $region26: #{_ffn_forward_pallas.1} parent=1 // pred_check
      _
    $region27: #{_ffn_forward_pallas.1} parent=1 // pred_check_branch
      %46 = sbr.rel (0) target = $region29
    $region28: #{_ffn_forward_pallas.1} parent=1 // pred_region
      %47 = dma.done [#allocation6], 1024
    $region29: #{_ffn_forward_pallas.1} parent=1 // pred_fallthru
      _
    %p49 = scmp.eq.s32.totalorder 0, 0
    // Predicated region
    $region30: #{_ffn_forward_pallas.1} parent=1 // pred_check
      %p50 = pneg %p49
    $region31: #{_ffn_forward_pallas.1} parent=1 // pred_check_branch
      %52 = sbr.rel (%p50) target = $region33
    $region32: #{_ffn_forward_pallas.1} parent=1 // pred_region
      %53 = vst [vmem:[#allocation2] sm:$0xff] 0.0
      %54 = vst [vmem:[#allocation2 + $0x8] sm:$0xff] 0.0
    $region33: #{_ffn_forward_pallas.1} parent=1 // pred_fallthru
      _
    %v55 = vld [vmem:[%s0] sm:$0xf]
    %v56 = vld [vmem:[%s0 + $0x4] sm:$0xf]
    %v57 = vld [vmem:[#allocation3] sm:$0xf]
    %v58 = vld [vmem:[#allocation3 + $0x4] sm:$0xf]
    %v59 = vld [vmem:[#allocation3 + $0x8] sm:$0xf]
    %v60 = vld [vmem:[#allocation3 + $0xc] sm:$0xf]
    %v61 = vld [vmem:[#allocation3 + $0x10] sm:$0xf]
    %v62 = vld [vmem:[#allocation3 + $0x14] sm:$0xf]
    %v63 = vld [vmem:[#allocation3 + $0x18] sm:$0xf]
    %v64 = vld [vmem:[#allocation3 + $0x1c] sm:$0xf]
    %v65 = vld [vmem:[#allocation3 + $0x20] sm:$0xf]
    %v66 = vld [vmem:[#allocation3 + $0x24] sm:$0xf]
    %v67 = vld [vmem:[#allocation3 + $0x28] sm:$0xf]
    %v68 = vld [vmem:[#allocation3 + $0x2c] sm:$0xf]
    %v69 = vld [vmem:[#allocation3 + $0x30] sm:$0xf]
    %v70 = vld [vmem:[#allocation3 + $0x34] sm:$0xf]
    %v71 = vld [vmem:[#allocation3 + $0x38] sm:$0xf]
    %v72 = vld [vmem:[#allocation3 + $0x3c] sm:$0xf]
    %v73 = vld [vmem:[%s2] sm:$0x1]
    %v75 = vlaneseq
    %v76 = vshrl.u32 %v75, 7
    %v77 = vsub.s32 0, %v76
    %v78 = vrot.slane %v73, %v77
    %v82 = vunpack.c.l.b16 %v55
    %v83 = vunpack.c.l.b16 %v56
    %v84 = vpack.c.b16 %v83, %v82
    %v102 = vunpack.c.l.b16 %v57
    %v103 = vunpack.c.l.b16 %v58
    %v104 = vunpack.c.l.b16 %v59
    %v105 = vunpack.c.l.b16 %v60
    %v106 = vunpack.c.l.b16 %v61
    %v107 = vunpack.c.l.b16 %v62
    %v108 = vunpack.c.l.b16 %v63
    %v109 = vunpack.c.l.b16 %v64
    %v110 = vunpack.c.l.b16 %v65
    %v111 = vunpack.c.l.b16 %v66
    %v112 = vunpack.c.l.b16 %v67
    %v113 = vunpack.c.l.b16 %v68
    %v114 = vunpack.c.l.b16 %v69
    %v115 = vunpack.c.l.b16 %v70
    %v116 = vunpack.c.l.b16 %v71
    %v117 = vunpack.c.l.b16 %v72
    %v118 = vpack.c.b16 %v103, %v102
    %v119 = vpack.c.b16 %v105, %v104
    %v120 = vpack.c.b16 %v107, %v106
    %v121 = vpack.c.b16 %v109, %v108
    %v122 = vpack.c.b16 %v111, %v110
    %v123 = vpack.c.b16 %v113, %v112
    %v124 = vpack.c.b16 %v115, %v114
    %v125 = vpack.c.b16 %v117, %v116
    %134 = vmatprep.subr.bf16.mxu0 0
    %135 = vmatpush1.bf16.msra.mxu0 %v118
    %136 = vmatprep.subr.bf16.mxu0 0
    %137 = vmatpush1.bf16.msra.mxu0 %v119
    %138 = vmatprep.subr.bf16.mxu0 0
    %139 = vmatpush1.bf16.msra.mxu0 %v120
    %140 = vmatprep.subr.bf16.mxu0 0
    %141 = vmatpush1.bf16.msra.mxu0 %v121
    %142 = vmatprep.subr.bf16.mxu0 0
    %143 = vmatpush1.bf16.msra.mxu0 %v122
    %144 = vmatprep.subr.bf16.mxu0 0
    %145 = vmatpush1.bf16.msra.mxu0 %v123
    %146 = vmatprep.subr.bf16.mxu0 0
    %147 = vmatpush1.bf16.msra.mxu0 %v124
    %148 = vmatprep.subr.bf16.mxu0 0
    %149 = vmatpush1.bf16.msra.mxu0 %v125
    %150 = vmatprep.subr.bf16.mxu0 0
    %151 = vmatpush1.bf16.msra.mxu0 0
    %152 = vmatprep.subr.bf16.mxu0 0
    %153 = vmatpush1.bf16.msra.mxu0 0
    %154 = vmatprep.subr.bf16.mxu0 0
    %155 = vmatpush1.bf16.msra.mxu0 0
    %156 = vmatprep.subr.bf16.mxu0 0
    %157 = vmatpush1.bf16.msra.mxu0 0
    %158 = vmatprep.subr.bf16.mxu0 0
    %159 = vmatpush1.bf16.msra.mxu0 0
    %160 = vmatprep.subr.bf16.mxu0 0
    %161 = vmatpush1.bf16.msra.mxu0 0
    %162 = vmatprep.subr.bf16.mxu0 0
    %163 = vmatpush1.bf16.msra.mxu0 0
    %164 = vmatprep.subr.bf16.mxu0 0
    %165 = vmatpush1.bf16.msra.mxu0 0
    %166 = vmatprep.mubr.bf16.mxu0 0
    %167 = vmatmul.mubr.bf16.gmra.mrb[0].mxu0 %v84
    %v168 = vpop.f32.mrb[0].mxu0
    %v169 = vadd.f32 %v78, %v168
    %v170 = vpop.f32.mrb[0].mxu0
    %v171 = vpop.f32.mrb[0].mxu0
    %v172 = vadd.f32 %v78, %v171
    %v173 = vpop.f32.mrb[0].mxu0
    %174 = vdwg.mxu0
    %v175 = vmax.f32 %v169, 0.0
    %v176 = vmax.f32 %v172, 0.0
    %v177 = vld [vmem:[#allocation2] sm:$0xff]
    %v178 = vld [vmem:[#allocation2 + $0x8] sm:$0xff]
    %v179 = vpack.c.bf16 %v176, %v175
    %v180 = vld [vmem:[#allocation5] sm:$0xf]
    %v181 = vld [vmem:[#allocation5 + $0x4] sm:$0xf]
    %v182 = vld [vmem:[#allocation5 + $0x8] sm:$0xf]
    %v183 = vld [vmem:[#allocation5 + $0xc] sm:$0xf]
    %v184 = vld [vmem:[#allocation5 + $0x10] sm:$0xf]
    %v185 = vld [vmem:[#allocation5 + $0x14] sm:$0xf]
    %v186 = vld [vmem:[#allocation5 + $0x18] sm:$0xf]
    %v187 = vld [vmem:[#allocation5 + $0x1c] sm:$0xf]
    %v188 = vld [vmem:[#allocation5 + $0x20] sm:$0xf]
    %v189 = vld [vmem:[#allocation5 + $0x24] sm:$0xf]
    %v190 = vld [vmem:[#allocation5 + $0x28] sm:$0xf]
    %v191 = vld [vmem:[#allocation5 + $0x2c] sm:$0xf]
    %v192 = vld [vmem:[#allocation5 + $0x30] sm:$0xf]
    %v193 = vld [vmem:[#allocation5 + $0x34] sm:$0xf]
    %v194 = vld [vmem:[#allocation5 + $0x38] sm:$0xf]
    %v195 = vld [vmem:[#allocation5 + $0x3c] sm:$0xf]
    %v212 = vunpack.c.l.b16 %v180
    %v213 = vunpack.c.l.b16 %v181
    %v214 = vunpack.c.l.b16 %v182
    %v215 = vunpack.c.l.b16 %v183
    %v216 = vunpack.c.l.b16 %v184
    %v217 = vunpack.c.l.b16 %v185
    %v218 = vunpack.c.l.b16 %v186
    %v219 = vunpack.c.l.b16 %v187
    %v220 = vunpack.c.l.b16 %v188
    %v221 = vunpack.c.l.b16 %v189
    %v222 = vunpack.c.l.b16 %v190
    %v223 = vunpack.c.l.b16 %v191
    %v224 = vunpack.c.l.b16 %v192
    %v225 = vunpack.c.l.b16 %v193
    %v226 = vunpack.c.l.b16 %v194
    %v227 = vunpack.c.l.b16 %v195
    %v228 = vpack.c.b16 %v213, %v212
    %v229 = vpack.c.b16 %v215, %v214
    %v230 = vpack.c.b16 %v217, %v216
    %v231 = vpack.c.b16 %v219, %v218
    %v232 = vpack.c.b16 %v221, %v220
    %v233 = vpack.c.b16 %v223, %v222
    %v234 = vpack.c.b16 %v225, %v224
    %v235 = vpack.c.b16 %v227, %v226
    %244 = vmatprep.subr.bf16.mxu0 0
    %245 = vmatpush1.bf16.msra.mxu0 %v228
    %246 = vmatprep.subr.bf16.mxu0 0
    %247 = vmatpush1.bf16.msra.mxu0 %v229
    %248 = vmatprep.subr.bf16.mxu0 0
    %249 = vmatpush1.bf16.msra.mxu0 %v230
    %250 = vmatprep.subr.bf16.mxu0 0
    %251 = vmatpush1.bf16.msra.mxu0 %v231
    %252 = vmatprep.subr.bf16.mxu0 0
    %253 = vmatpush1.bf16.msra.mxu0 %v232
    %254 = vmatprep.subr.bf16.mxu0 0
    %255 = vmatpush1.bf16.msra.mxu0 %v233
    %256 = vmatprep.subr.bf16.mxu0 0
    %257 = vmatpush1.bf16.msra.mxu0 %v234
    %258 = vmatprep.subr.bf16.mxu0 0
    %259 = vmatpush1.bf16.msra.mxu0 %v235
    %260 = vmatprep.subr.bf16.mxu0 0
    %261 = vmatpush1.bf16.msra.mxu0 0
    %262 = vmatprep.subr.bf16.mxu0 0
    %263 = vmatpush1.bf16.msra.mxu0 0
    %264 = vmatprep.subr.bf16.mxu0 0
    %265 = vmatpush1.bf16.msra.mxu0 0
    %266 = vmatprep.subr.bf16.mxu0 0
    %267 = vmatpush1.bf16.msra.mxu0 0
    %268 = vmatprep.subr.bf16.mxu0 0
    %269 = vmatpush1.bf16.msra.mxu0 0
    %270 = vmatprep.subr.bf16.mxu0 0
    %271 = vmatpush1.bf16.msra.mxu0 0
    %272 = vmatprep.subr.bf16.mxu0 0
    %273 = vmatpush1.bf16.msra.mxu0 0
    %274 = vmatprep.subr.bf16.mxu0 0
    %275 = vmatpush1.bf16.msra.mxu0 0
    %276 = vmatprep.mubr.bf16.mxu0 0
    %277 = vmatmul.mubr.bf16.gmra.mrb[0].mxu0 %v179
    %v278 = vpop.f32.mrb[0].mxu0
    %v279 = vadd.f32 0.0, %v278
    %v280 = vpop.f32.mrb[0].mxu0
    %v281 = vpop.f32.mrb[0].mxu0
    %v282 = vadd.f32 0.0, %v281
    %v283 = vpop.f32.mrb[0].mxu0
    %284 = vdwg.mxu0
    %v285 = vadd.f32 %v177, %v279
    %v286 = vadd.f32 %v178, %v282
    %287 = vst [vmem:[#allocation2] sm:$0xff] %v285
    %288 = vst [vmem:[#allocation2 + $0x8] sm:$0xff] %v286
    // Predicated region
    $region34: #{_ffn_forward_pallas.1} parent=1 // pred_check
      %p289 = pneg %p49
    $region35: #{_ffn_forward_pallas.1} parent=1 // pred_check_branch
      %291 = sbr.rel (%p289) target = $region37
    $region36: #{_ffn_forward_pallas.1} parent=1 // pred_region
      %v292 = vld [vmem:[#allocation2] sm:$0xff]
      %v293 = vld [vmem:[#allocation2 + $0x8] sm:$0xff]
      %v294 = vld [vmem:[%s4] sm:$0x1]
      %v296 = vlaneseq
      %v297 = vshrl.u32 %v296, 7
      %v298 = vsub.s32 0, %v297
      %v299 = vrot.slane %v294, %v298
      %v301 = vadd.f32 %v292, %v299
      %v302 = vadd.f32 %v293, %v299
      %303 = vst [vmem:[%s5] sm:$0xff] %v301
      %304 = vst [vmem:[%s5 + $0x8] sm:$0xff] %v302
    $region37: #{_ffn_forward_pallas.1} parent=1 // pred_fallthru
      _
    // Predicated region
    $region38: #{_ffn_forward_pallas.1} parent=1 // pred_check
      _
    $region39: #{_ffn_forward_pallas.1} parent=1 // pred_check_branch
      %306 = sbr.rel (0) target = $region41
    $region40: #{_ffn_forward_pallas.1} parent=1 // pred_region
      _
    $region41: #{_ffn_forward_pallas.1} parent=1 // pred_fallthru
      _
    // Predicated region
    $region42: #{_ffn_forward_pallas.1} parent=1 // pred_check
      _
    $region43: #{_ffn_forward_pallas.1} parent=1 // pred_check_branch
      %308 = sbr.rel (0) target = $region45
    $region44: #{_ffn_forward_pallas.1} parent=1 // pred_region
      _
    $region45: #{_ffn_forward_pallas.1} parent=1 // pred_fallthru
      _
    %309 = vsyncpa [#allocation4], 1
    %310 = vsyncpa [#allocation6], 1

</llo_original>
